<compile_context>
chip_gen: v6e
topology: v6e:2x2x1
jax: 0.10.0
libtpu: 0.0.40
codegen_flags: <defaults>
</compile_context>

<pallas_src>
import functools

import jax
import jax.numpy as jnp
from jax.experimental import pallas as pl
from jax.experimental.pallas import tpu as pltpu

_LANE = 128
_SUBLANE = 8


def _round_up(n, m):
    return (n + m - 1) // m * m


def _qnet_kernel(x_ref, w_ref, b_ref, o_ref, *, dims, compute_dtype):
    """One batch tile: 3 matmuls + biases + 2 ReLUs, entirely in VMEM.

    dims = (state_dim, p1, p2, ap) with p1/p2/ap the lane-padded (x128) widths of
    the three layers. Matmul operands optionally cast to bf16; accumulation and
    the bias/ReLU epilogue stay f32 (cheap on VPU, exact).
    """
    sd, p1, p2, ap = dims
    f32 = jnp.float32

    x = x_ref[...].astype(compute_dtype)                     # (TM, sd)

    w1 = w_ref[0, :sd, :p1].astype(compute_dtype)            # (sd, p1)
    h1 = jnp.dot(x, w1, preferred_element_type=f32) + b_ref[0:1, :p1]
    h1 = jnp.maximum(h1, 0.0)

    w2 = w_ref[1, :p1, :p2].astype(compute_dtype)            # (p1, p2)
    h2 = jnp.dot(h1.astype(compute_dtype), w2, preferred_element_type=f32)
    h2 = jnp.maximum(h2 + b_ref[1:2, :p2], 0.0)

    w3 = w_ref[2, :p2, :ap].astype(compute_dtype)            # (p2, ap)
    o_ref[...] = (
        jnp.dot(h2.astype(compute_dtype), w3, preferred_element_type=f32)
        + b_ref[2:3, :ap]
    )


def pack_params(params):
    """Pack/pad the 6 parameter arrays into 2 lane-dense arrays (do this ONCE,
    outside any RL/eval loop, and keep the result device-resident)."""
    w1, b1 = params["w1"], params["b1"]
    w2, b2 = params["w2"], params["b2"]
    w3, b3 = params["w3"], params["b3"]
    sd, h1d = w1.shape
    _, hid = w2.shape
    _, act = w3.shape

    p1 = _round_up(h1d, _LANE)
    p2 = _round_up(hid, _LANE)
    ap = _round_up(act, _LANE)
    kp = max(_round_up(sd, _SUBLANE), p1, p2)
    npad = max(p1, p2, ap)

    wp = jnp.zeros((3, kp, npad), jnp.float32)
    wp = wp.at[0, :sd, :h1d].set(w1)
    wp = wp.at[1, :h1d, :hid].set(w2)
    wp = wp.at[2, :hid, :act].set(w3)

    bp = jnp.zeros((3, npad), jnp.float32)
    bp = bp.at[0, :h1d].set(b1.reshape(-1))
    bp = bp.at[1, :hid].set(b2.reshape(-1))
    bp = bp.at[2, :act].set(b3.reshape(-1))

    dims = (int(sd), int(p1), int(p2), int(ap), int(act))
    return wp, bp, dims


@functools.partial(
    jax.jit, static_argnames=("dims", "compute_dtype", "block_rows")
)
def qnet_forward(x, w_packed, b_packed, *, dims,
                 compute_dtype=jnp.float32, block_rows=512):
    """x: (batch, state_dim) f32. Returns (batch, action_dim) f32."""
    sd, p1, p2, ap, act = dims
    batch = x.shape[0]

    # Batch tile: multiple of 8 sublanes, capped at block_rows (VMEM-friendly on
    # v7x's 64 MiB as well: tiles here are <1 MiB).
    tm = min(block_rows, _round_up(batch, _SUBLANE))
    b_pad = _round_up(batch, tm)
    if b_pad != batch:
        x = jnp.pad(x, ((0, b_pad - batch), (0, 0)))

    kp, npad = w_packed.shape[1], w_packed.shape[2]
    kernel = functools.partial(
        _qnet_kernel, dims=(sd, p1, p2, ap), compute_dtype=compute_dtype
    )

    out = pl.pallas_call(
        kernel,
        out_shape=jax.ShapeDtypeStruct((b_pad, ap), jnp.float32),
        grid=(b_pad // tm,),
        in_specs=[
            # x: tiled over batch -> pipelined DMA overlaps compute.
            pl.BlockSpec((tm, sd), lambda i: (i, 0)),
            # packed weights / biases: constant block index -> VMEM-resident,
            # DMA'd once per call regardless of grid length.
            pl.BlockSpec((3, kp, npad), lambda i: (0, 0, 0)),
            pl.BlockSpec((3, npad), lambda i: (0, 0)),
        ],
        # lane-dense (TM, 128) output slab -> unmasked stores; sliced below.
        out_specs=pl.BlockSpec((tm, ap), lambda i: (i, 0)),
        compiler_params=pltpu.CompilerParams(
            dimension_semantics=("parallel",),
        ),
    )(x, w_packed, b_packed)

    return out[:batch, :act]


def init_params(key, state_dim, hidden_dim, action_dim):
    """Deterministic synthetic init (PyTorch-Linear-like uniform fan-in scaling)."""
    ks = jax.random.split(key, 6)

    def lin(kw, kb, fan_in, fan_out):
        bound = 1.0 / jnp.sqrt(fan_in)
        w = jax.random.uniform(kw, (fan_in, fan_out), jnp.float32, -bound, bound)
        b = jax.random.uniform(kb, (1, fan_out), jnp.float32, -bound, bound)
        return w, b

    w1, b1 = lin(ks[0], ks[1], state_dim, 64)
    w2, b2 = lin(ks[2], ks[3], 64, hidden_dim)
    w3, b3 = lin(ks[4], ks[5], hidden_dim, action_dim)
    return {"w1": w1, "b1": b1, "w2": w2, "b2": b2, "w3": w3, "b3": b3}


if __name__ == "__main__":
    key = jax.random.PRNGKey(0)
    k_x, k_p, k_big = jax.random.split(key, 3)

    batch, state_dim, hidden_dim, action_dim = 2, 4, 32, 2
    x = jax.random.normal(k_x, (batch, state_dim), jnp.float32)
    params = init_params(k_p, state_dim, hidden_dim, action_dim)
    w_packed, b_packed, dims = pack_params(params)

    def ref_fn(xs):
        h1 = jnp.maximum(xs @ params["w1"] + params["b1"], 0.0)
        h2 = jnp.maximum(h1 @ params["w2"] + params["b2"], 0.0)
        return h2 @ params["w3"] + params["b3"]

    # Small (spec-sized) batch, f32 path: exact check against JAX reference.
    out = jax.block_until_ready(qnet_forward(x, w_packed, b_packed, dims=dims))
    ref = ref_fn(x)
    assert out.shape == (batch, action_dim)
    assert jnp.allclose(out, ref, atol=1e-5, rtol=1e-5)

    # Large batch exercising the batch grid (multiple tiles, parallel axis) with
    # bf16 matmul operands + f32 accumulate/epilogue.
    big_batch = 1024
    xb = jax.random.normal(k_big, (big_batch, state_dim), jnp.float32)
    out_big = jax.block_until_ready(
        qnet_forward(xb, w_packed, b_packed, dims=dims,
                     compute_dtype=jnp.bfloat16, block_rows=512)
    )
    ref_big = ref_fn(xb)
    assert out_big.shape == (big_batch, action_dim)
    assert jnp.allclose(out_big, ref_big, atol=5e-2, rtol=5e-2)

    print("KERNEL_OK")
</pallas_src>

<mosaic_0001>
module attributes {stable_mosaic.version = 11 : i64} {
  func.func @_qnet_kernel(%arg0: i32, %arg1: memref<8x4xf32, #tpu.memory_space<vmem>>, %arg2: memref<3x128x128xf32, #tpu.memory_space<vmem>>, %arg3: memref<3x128xf32, #tpu.memory_space<vmem>>, %arg4: memref<8x128xf32, #tpu.memory_space<vmem>>) attributes {dimension_semantics = [#tpu.dimension_semantics<parallel>], iteration_bounds = array<i64: 1>, scalar_prefetch = 0 : i64, scratch_operands = 0 : i64, tpu.core_type = #tpu.core_type<tc>, window_params = [{transform_indices = @transform_0, window_bounds = array<i64: 8, 4>}, {pipeline_mode = #tpu.pipeline_mode<synchronous>, transform_indices = @transform_1, window_bounds = array<i64: 3, 128, 128>}, {pipeline_mode = #tpu.pipeline_mode<synchronous>, transform_indices = @transform_2, window_bounds = array<i64: 3, 128>}, {transform_indices = @transform_3, window_bounds = array<i64: 8, 128>}]} {
    %c0 = arith.constant 0 : index
    %c0_0 = arith.constant 0 : index
    %0 = vector.load %arg1[%c0, %c0_0] : memref<8x4xf32, #tpu.memory_space<vmem>>, vector<8x4xf32>
    %c0_1 = arith.constant 0 : index
    %c0_2 = arith.constant 0 : index
    %c0_3 = arith.constant 0 : index
    %1 = vector.load %arg2[%c0_1, %c0_2, %c0_3] : memref<3x128x128xf32, #tpu.memory_space<vmem>>, vector<1x4x128xf32>
    %2 = vector.shape_cast %1 : vector<1x4x128xf32> to vector<4x128xf32>
    %cst = arith.constant dense<0.000000e+00> : vector<8x128xf32>
    %3 = tpu.matmul %0, %2, %cst {dimension_numbers = #tpu.dot_dimension_numbers<[1], [0], [0], [1], [0, 0, 1, 1], [], []>} : vector<8x4xf32>, vector<4x128xf32>, vector<8x128xf32> -> vector<8x128xf32>
    %c0_4 = arith.constant 0 : index
    %c0_5 = arith.constant 0 : index
    %4 = vector.load %arg3[%c0_4, %c0_5] : memref<3x128xf32, #tpu.memory_space<vmem>>, vector<1x128xf32>
    %5 = vector.broadcast %4 : vector<1x128xf32> to vector<8x128xf32>
    %6 = arith.addf %3, %5 : vector<8x128xf32>
    %cst_6 = arith.constant 0.000000e+00 : f32
    %7 = vector.broadcast %cst_6 : f32 to vector<8x128xf32>
    %8 = arith.maximumf %6, %7 : vector<8x128xf32>
    %c1 = arith.constant 1 : index
    %c0_7 = arith.constant 0 : index
    %c0_8 = arith.constant 0 : index
    %9 = vector.load %arg2[%c1, %c0_7, %c0_8] : memref<3x128x128xf32, #tpu.memory_space<vmem>>, vector<1x128x128xf32>
    %10 = vector.shape_cast %9 : vector<1x128x128xf32> to vector<128x128xf32>
    %cst_9 = arith.constant dense<0.000000e+00> : vector<8x128xf32>
    %11 = tpu.matmul %8, %10, %cst_9 {dimension_numbers = #tpu.dot_dimension_numbers<[1], [0], [0], [1], [0, 0, 1, 1], [], []>} : vector<8x128xf32>, vector<128x128xf32>, vector<8x128xf32> -> vector<8x128xf32>
    %c1_10 = arith.constant 1 : index
    %c0_11 = arith.constant 0 : index
    %12 = vector.load %arg3[%c1_10, %c0_11] : memref<3x128xf32, #tpu.memory_space<vmem>>, vector<1x128xf32>
    %13 = vector.broadcast %12 : vector<1x128xf32> to vector<8x128xf32>
    %14 = arith.addf %11, %13 : vector<8x128xf32>
    %cst_12 = arith.constant 0.000000e+00 : f32
    %15 = vector.broadcast %cst_12 : f32 to vector<8x128xf32>
    %16 = arith.maximumf %14, %15 : vector<8x128xf32>
    %c2 = arith.constant 2 : index
    %c0_13 = arith.constant 0 : index
    %c0_14 = arith.constant 0 : index
    %17 = vector.load %arg2[%c2, %c0_13, %c0_14] : memref<3x128x128xf32, #tpu.memory_space<vmem>>, vector<1x128x128xf32>
    %18 = vector.shape_cast %17 : vector<1x128x128xf32> to vector<128x128xf32>
    %cst_15 = arith.constant dense<0.000000e+00> : vector<8x128xf32>
    %19 = tpu.matmul %16, %18, %cst_15 {dimension_numbers = #tpu.dot_dimension_numbers<[1], [0], [0], [1], [0, 0, 1, 1], [], []>} : vector<8x128xf32>, vector<128x128xf32>, vector<8x128xf32> -> vector<8x128xf32>
    %c2_16 = arith.constant 2 : index
    %c0_17 = arith.constant 0 : index
    %20 = vector.load %arg3[%c2_16, %c0_17] : memref<3x128xf32, #tpu.memory_space<vmem>>, vector<1x128xf32>
    %21 = vector.broadcast %20 : vector<1x128xf32> to vector<8x128xf32>
    %22 = arith.addf %19, %21 : vector<8x128xf32>
    %c0_18 = arith.constant 0 : index
    %c0_19 = arith.constant 0 : index
    %23 = vector.load %arg4[%c0_18, %c0_19] : memref<8x128xf32, #tpu.memory_space<vmem>>, vector<8x128xf32>
    tpu.vector_store %arg4[%c0_18, %c0_19], %22 {strides = array<i32>} : memref<8x128xf32, #tpu.memory_space<vmem>>, vector<8x128xf32>,
    return
  }
  func.func @transform_0(%arg0: i32) -> (i32, i32) {
    %c0_i32 = arith.constant 0 : i32
    %c0_i32_0 = arith.constant 0 : i32
    return %arg0, %c0_i32 : i32, i32
  }
  func.func @transform_1(%arg0: i32) -> (i32, i32, i32) {
    %c0_i32 = arith.constant 0 : i32
    %c0_i32_0 = arith.constant 0 : i32
    %c0_i32_1 = arith.constant 0 : i32
    %c0_i32_2 = arith.constant 0 : i32
    return %c0_i32, %c0_i32_0, %c0_i32_1 : i32, i32, i32
  }
  func.func @transform_2(%arg0: i32) -> (i32, i32) {
    %c0_i32 = arith.constant 0 : i32
    %c0_i32_0 = arith.constant 0 : i32
    %c0_i32_1 = arith.constant 0 : i32
    return %c0_i32, %c0_i32_0 : i32, i32
  }
  func.func @transform_3(%arg0: i32) -> (i32, i32) {
    %c0_i32 = arith.constant 0 : i32
    %c0_i32_0 = arith.constant 0 : i32
    return %arg0, %c0_i32 : i32, i32
  }
}

</mosaic_0001>

<llo_original>
// kernel: qnet_forward.1
$region0: #{qnet_forward.1}
  #allocation0 [shape = 'u32[]', space=smem, size = 0x4, offset = 0x4, fixed_abs, tag = 'smem constant byte address 0x4 - core index']
  #allocation1 [shape = 'u32[144,128]{1,0:T(1,128)}', space=vmem, size = 0x12000, scoped, tag = 'internal scratch']
  %s0 = inlined_call_operand.vmem [shape: f32[8,4], index: 0, kind: input, shape index: {}]
  %s1 = inlined_call_operand.hbm [shape: f32[3,128,128], index: 1, kind: input, shape index: {}]
  %s2 = inlined_call_operand.vmem [shape: f32[3,128], index: 2, kind: input, shape index: {}]
  %s3 = inlined_call_operand.vmem [shape: f32[8,128], index: 3, kind: output, shape index: {}]
  %s4 = sld [smem:[#allocation0]]
  $region26: #{qnet_forward.1} parent=0
    _
  %s6 = ssub.s32 1, %s4
  %s7 = scalar_select 0, %s6, %s4
  $region1: #{qnet_forward.1} parent=0
    #allocation2 [shape = 'u8[196608]{0}', space=vmem, size = 0x30000, scoped, tag = 'input window, operand 1, single buffered']
    #allocation3 [shape = 's32[1]{0}', space=sflag, size = 0x4, scoped, tag = 'scoped memory for qnet_forward.1']
    %8 = vsyncpa [#allocation3], 0
    // Predicated region
    $region2: #{qnet_forward.1} parent=1 // pred_check
      _
    $region3: #{qnet_forward.1} parent=1 // pred_check_branch
      %10 = sbr.rel (0) target = $region5
    $region4: #{qnet_forward.1} parent=1 // pred_region
      _
    $region5: #{qnet_forward.1} parent=1 // pred_fallthru
      _
    // Predicated region
    $region6: #{qnet_forward.1} parent=1 // pred_check
      _
    $region7: #{qnet_forward.1} parent=1 // pred_check_branch
      %12 = sbr.rel (0) target = $region9
    $region8: #{qnet_forward.1} parent=1 // pred_region
      %s14 = ssub.s32 6144, 6144
      %15 = vsyncadd [#allocation3], %s14
      %s16 = sshll.u32 [#allocation2], 4
      %s17 = int_to_ptr.vmem [resolvable:$true] %s16
      %22 = dma.hbm_to_vmem [thread:$0]  %s1, 6144, %s17, [#allocation3], 128, 128, 8
    $region9: #{qnet_forward.1} parent=1 // pred_fallthru
      _
    // Predicated region
    $region10: #{qnet_forward.1} parent=1 // pred_check
      _
    $region11: #{qnet_forward.1} parent=1 // pred_check_branch
      %24 = sbr.rel (0) target = $region13
    $region12: #{qnet_forward.1} parent=1 // pred_region
      _
    $region13: #{qnet_forward.1} parent=1 // pred_fallthru
      _
    // Predicated region
    $region14: #{qnet_forward.1} parent=1 // pred_check
      _
    $region15: #{qnet_forward.1} parent=1 // pred_check_branch
      %26 = sbr.rel (0) target = $region17
    $region16: #{qnet_forward.1} parent=1 // pred_region
      %27 = dma.done [#allocation3], 6144
    $region17: #{qnet_forward.1} parent=1 // pred_fallthru
      _
    %v28 = vld [vmem:[%s0] sm:$0xff]
    %v29 = vld [vmem:[#allocation2] sm:$0xf]
    %v30 = vld [vmem:[%s2] sm:$0x1]
    %v31 = vlaneseq
    %v32 = vshrl.u32 %v31, 7
    %v33 = vsub.s32 0, %v32
    %v34 = vrot.slane %v30, %v33
    %vm35 = vcmask 31744
    %v37 = vsel %vm35, %v28, 0
    %vm39 = vcmask 1043456
    %v41 = vsel %vm39, %v29, 0
    %43 = vmatprep.subr.mxu0 0.0
    %44 = vmatpush1.msra.mxu0 0.0
    %45 = vmatprep.subr.mxu0 0.0
    %46 = vmatpush1.msra.mxu0 0.0
    %47 = vmatprep.subr.mxu0 0.0
    %48 = vmatpush1.msra.mxu0 0.0
    %49 = vmatprep.subr.mxu0 0.0
    %50 = vmatpush1.msra.mxu0 0.0
    %51 = vmatprep.subr.mxu0 0.0
    %52 = vmatpush1.msra.mxu0 0.0
    %53 = vmatprep.subr.mxu0 0.0
    %54 = vmatpush1.msra.mxu0 0.0
    %55 = vmatprep.subr.mxu0 0.0
    %56 = vmatpush1.msra.mxu0 0.0
    %57 = vmatprep.subr.mxu0 0.0
    %58 = vmatpush1.msra.mxu0 0.0
    %59 = vmatprep.subr.mxu0 0.0
    %60 = vmatpush1.msra.mxu0 0.0
    %61 = vmatprep.subr.mxu0 0.0
    %62 = vmatpush1.msra.mxu0 0.0
    %63 = vmatprep.subr.mxu0 0.0
    %64 = vmatpush1.msra.mxu0 0.0
    %65 = vmatprep.subr.mxu0 0.0
    %66 = vmatpush1.msra.mxu0 0.0
    %67 = vmatprep.subr.mxu0 0.0
    %68 = vmatpush1.msra.mxu0 0.0
    %69 = vmatprep.subr.mxu0 0.0
    %70 = vmatpush1.msra.mxu0 0.0
    %71 = vmatprep.subr.mxu0 0.0
    %72 = vmatpush1.msra.mxu0 0.0
    %73 = vmatprep.subr.mxu0 0.0
    %74 = vmatpush1.msra.mxu0 %v41
    %75 = vmatprep.subr.mxu0 0.0
    %76 = vmatpush2.msra.mxu0 0.0
    %77 = vmatprep.subr.mxu0 0.0
    %78 = vmatpush2.msra.mxu0 0.0
    %79 = vmatprep.subr.mxu0 0.0
    %80 = vmatpush2.msra.mxu0 0.0
    %81 = vmatprep.subr.mxu0 0.0
    %82 = vmatpush2.msra.mxu0 0.0
    %83 = vmatprep.subr.mxu0 0.0
    %84 = vmatpush2.msra.mxu0 0.0
    %85 = vmatprep.subr.mxu0 0.0
    %86 = vmatpush2.msra.mxu0 0.0
    %87 = vmatprep.subr.mxu0 0.0
    %88 = vmatpush2.msra.mxu0 0.0
    %89 = vmatprep.subr.mxu0 0.0
    %90 = vmatpush2.msra.mxu0 0.0
    %91 = vmatprep.subr.mxu0 0.0
    %92 = vmatpush2.msra.mxu0 0.0
    %93 = vmatprep.subr.mxu0 0.0
    %94 = vmatpush2.msra.mxu0 0.0
    %95 = vmatprep.subr.mxu0 0.0
    %96 = vmatpush2.msra.mxu0 0.0
    %97 = vmatprep.subr.mxu0 0.0
    %98 = vmatpush2.msra.mxu0 0.0
    %99 = vmatprep.subr.mxu0 0.0
    %100 = vmatpush2.msra.mxu0 0.0
    %101 = vmatprep.subr.mxu0 0.0
    %102 = vmatpush2.msra.mxu0 0.0
    %103 = vmatprep.subr.mxu0 0.0
    %104 = vmatpush2.msra.mxu0 0.0
    %105 = vmatprep.subr.mxu0 0.0
    %106 = vmatpush2.msra.mxu0 0.0
    %107 = vmatprep.mubr.f32.mxu0 0.0
    %108 = vmatmul.mubr.f32.gmra.mxu0 %v37
    %v109 = vpop.f32.mrf.mxu0
    %v110 = vadd.f32 %v34, %v109
    %v111 = vpop.f32.mrf.mxu0
    %112 = vdwg.mxu0
    %v113 = vmax.f32 %v110, 0.0
    %s114 = scalar_lea.vmem [#allocation2], 128
    %v115 = vld [vmem:[%s114] sm:$0xff]
    %v116 = vld [vmem:[%s114 + $0x8] sm:$0xff]
    %v117 = vld [vmem:[%s114 + $0x10] sm:$0xff]
    %v118 = vld [vmem:[%s114 + $0x18] sm:$0xff]
    %v119 = vld [vmem:[%s114 + $0x20] sm:$0xff]
    %v120 = vld [vmem:[%s114 + $0x28] sm:$0xff]
    %v121 = vld [vmem:[%s114 + $0x30] sm:$0xff]
    %v122 = vld [vmem:[%s114 + $0x38] sm:$0xff]
    %v123 = vld [vmem:[%s114 + $0x40] sm:$0xff]
    %v124 = vld [vmem:[%s114 + $0x48] sm:$0xff]
    %v125 = vld [vmem:[%s114 + $0x50] sm:$0xff]
    %v126 = vld [vmem:[%s114 + $0x58] sm:$0xff]
    %v127 = vld [vmem:[%s114 + $0x60] sm:$0xff]
    %v128 = vld [vmem:[%s114 + $0x68] sm:$0xff]
    %v129 = vld [vmem:[%s114 + $0x70] sm:$0xff]
    %v130 = vld [vmem:[%s114 + $0x78] sm:$0xff]
    %v131 = vld [vmem:[%s2 + $0x1] sm:$0x1]
    %v132 = vlaneseq
    %v133 = vshrl.u32 %v132, 7
    %v134 = vsub.s32 0, %v133
    %v135 = vrot.slane %v131, %v134
    %136 = vmatprep.subr.mxu0 0.0
    %137 = vmatpush1.msra.mxu0 %v130
    %138 = vmatprep.subr.mxu0 0.0
    %139 = vmatpush1.msra.mxu0 %v129
    %140 = vmatprep.subr.mxu0 0.0
    %141 = vmatpush1.msra.mxu0 %v128
    %142 = vmatprep.subr.mxu0 0.0
    %143 = vmatpush1.msra.mxu0 %v127
    %144 = vmatprep.subr.mxu0 0.0
    %145 = vmatpush1.msra.mxu0 %v126
    %146 = vmatprep.subr.mxu0 0.0
    %147 = vmatpush1.msra.mxu0 %v125
    %148 = vmatprep.subr.mxu0 0.0
    %149 = vmatpush1.msra.mxu0 %v124
    %150 = vmatprep.subr.mxu0 0.0
    %151 = vmatpush1.msra.mxu0 %v123
    %152 = vmatprep.subr.mxu0 0.0
    %153 = vmatpush1.msra.mxu0 %v122
    %154 = vmatprep.subr.mxu0 0.0
    %155 = vmatpush1.msra.mxu0 %v121
    %156 = vmatprep.subr.mxu0 0.0
    %157 = vmatpush1.msra.mxu0 %v120
    %158 = vmatprep.subr.mxu0 0.0
    %159 = vmatpush1.msra.mxu0 %v119
    %160 = vmatprep.subr.mxu0 0.0
    %161 = vmatpush1.msra.mxu0 %v118
    %162 = vmatprep.subr.mxu0 0.0
    %163 = vmatpush1.msra.mxu0 %v117
    %164 = vmatprep.subr.mxu0 0.0
    %165 = vmatpush1.msra.mxu0 %v116
    %166 = vmatprep.subr.mxu0 0.0
    %167 = vmatpush1.msra.mxu0 %v115
    %168 = vmatprep.subr.mxu0 0.0
    %169 = vmatpush2.msra.mxu0 0.0
    %170 = vmatprep.subr.mxu0 0.0
    %171 = vmatpush2.msra.mxu0 0.0
    %172 = vmatprep.subr.mxu0 0.0
    %173 = vmatpush2.msra.mxu0 0.0
    %174 = vmatprep.subr.mxu0 0.0
    %175 = vmatpush2.msra.mxu0 0.0
    %176 = vmatprep.subr.mxu0 0.0
    %177 = vmatpush2.msra.mxu0 0.0
    %178 = vmatprep.subr.mxu0 0.0
    %179 = vmatpush2.msra.mxu0 0.0
    %180 = vmatprep.subr.mxu0 0.0
    %181 = vmatpush2.msra.mxu0 0.0
    %182 = vmatprep.subr.mxu0 0.0
    %183 = vmatpush2.msra.mxu0 0.0
    %184 = vmatprep.subr.mxu0 0.0
    %185 = vmatpush2.msra.mxu0 0.0
    %186 = vmatprep.subr.mxu0 0.0
    %187 = vmatpush2.msra.mxu0 0.0
    %188 = vmatprep.subr.mxu0 0.0
    %189 = vmatpush2.msra.mxu0 0.0
    %190 = vmatprep.subr.mxu0 0.0
    %191 = vmatpush2.msra.mxu0 0.0
    %192 = vmatprep.subr.mxu0 0.0
    %193 = vmatpush2.msra.mxu0 0.0
    %194 = vmatprep.subr.mxu0 0.0
    %195 = vmatpush2.msra.mxu0 0.0
    %196 = vmatprep.subr.mxu0 0.0
    %197 = vmatpush2.msra.mxu0 0.0
    %198 = vmatprep.subr.mxu0 0.0
    %199 = vmatpush2.msra.mxu0 0.0
    %200 = vmatprep.mubr.f32.mxu0 0.0
    %201 = vmatmul.mubr.f32.gmra.mxu0 %v113
    %v202 = vpop.f32.mrf.mxu0
    %v203 = vadd.f32 %v135, %v202
    %v204 = vpop.f32.mrf.mxu0
    %205 = vdwg.mxu0
    %v206 = vmax.f32 %v203, 0.0
    %s207 = scalar_lea.vmem [#allocation2], 256
    %v208 = vld [vmem:[%s207] sm:$0xff]
    %v209 = vld [vmem:[%s207 + $0x8] sm:$0xff]
    %v210 = vld [vmem:[%s207 + $0x10] sm:$0xff]
    %v211 = vld [vmem:[%s207 + $0x18] sm:$0xff]
    %v212 = vld [vmem:[%s207 + $0x20] sm:$0xff]
    %v213 = vld [vmem:[%s207 + $0x28] sm:$0xff]
    %v214 = vld [vmem:[%s207 + $0x30] sm:$0xff]
    %v215 = vld [vmem:[%s207 + $0x38] sm:$0xff]
    %v216 = vld [vmem:[%s207 + $0x40] sm:$0xff]
    %v217 = vld [vmem:[%s207 + $0x48] sm:$0xff]
    %v218 = vld [vmem:[%s207 + $0x50] sm:$0xff]
    %v219 = vld [vmem:[%s207 + $0x58] sm:$0xff]
    %v220 = vld [vmem:[%s207 + $0x60] sm:$0xff]
    %v221 = vld [vmem:[%s207 + $0x68] sm:$0xff]
    %v222 = vld [vmem:[%s207 + $0x70] sm:$0xff]
    %v223 = vld [vmem:[%s207 + $0x78] sm:$0xff]
    %v224 = vld [vmem:[%s2 + $0x2] sm:$0x1]
    %v225 = vlaneseq
    %v226 = vshrl.u32 %v225, 7
    %v227 = vsub.s32 0, %v226
    %v228 = vrot.slane %v224, %v227
    %229 = vmatprep.subr.mxu0 0.0
    %230 = vmatpush1.msra.mxu0 %v223
    %231 = vmatprep.subr.mxu0 0.0
    %232 = vmatpush1.msra.mxu0 %v222
    %233 = vmatprep.subr.mxu0 0.0
    %234 = vmatpush1.msra.mxu0 %v221
    %235 = vmatprep.subr.mxu0 0.0
    %236 = vmatpush1.msra.mxu0 %v220
    %237 = vmatprep.subr.mxu0 0.0
    %238 = vmatpush1.msra.mxu0 %v219
    %239 = vmatprep.subr.mxu0 0.0
    %240 = vmatpush1.msra.mxu0 %v218
    %241 = vmatprep.subr.mxu0 0.0
    %242 = vmatpush1.msra.mxu0 %v217
    %243 = vmatprep.subr.mxu0 0.0
    %244 = vmatpush1.msra.mxu0 %v216
    %245 = vmatprep.subr.mxu0 0.0
    %246 = vmatpush1.msra.mxu0 %v215
    %247 = vmatprep.subr.mxu0 0.0
    %248 = vmatpush1.msra.mxu0 %v214
    %249 = vmatprep.subr.mxu0 0.0
    %250 = vmatpush1.msra.mxu0 %v213
    %251 = vmatprep.subr.mxu0 0.0
    %252 = vmatpush1.msra.mxu0 %v212
    %253 = vmatprep.subr.mxu0 0.0
    %254 = vmatpush1.msra.mxu0 %v211
    %255 = vmatprep.subr.mxu0 0.0
    %256 = vmatpush1.msra.mxu0 %v210
    %257 = vmatprep.subr.mxu0 0.0
    %258 = vmatpush1.msra.mxu0 %v209
    %259 = vmatprep.subr.mxu0 0.0
    %260 = vmatpush1.msra.mxu0 %v208
    %261 = vmatprep.subr.mxu0 0.0
    %262 = vmatpush2.msra.mxu0 0.0
    %263 = vmatprep.subr.mxu0 0.0
    %264 = vmatpush2.msra.mxu0 0.0
    %265 = vmatprep.subr.mxu0 0.0
    %266 = vmatpush2.msra.mxu0 0.0
    %267 = vmatprep.subr.mxu0 0.0
    %268 = vmatpush2.msra.mxu0 0.0
    %269 = vmatprep.subr.mxu0 0.0
    %270 = vmatpush2.msra.mxu0 0.0
    %271 = vmatprep.subr.mxu0 0.0
    %272 = vmatpush2.msra.mxu0 0.0
    %273 = vmatprep.subr.mxu0 0.0
    %274 = vmatpush2.msra.mxu0 0.0
    %275 = vmatprep.subr.mxu0 0.0
    %276 = vmatpush2.msra.mxu0 0.0
    %277 = vmatprep.subr.mxu0 0.0
    %278 = vmatpush2.msra.mxu0 0.0
    %279 = vmatprep.subr.mxu0 0.0
    %280 = vmatpush2.msra.mxu0 0.0
    %281 = vmatprep.subr.mxu0 0.0
    %282 = vmatpush2.msra.mxu0 0.0
    %283 = vmatprep.subr.mxu0 0.0
    %284 = vmatpush2.msra.mxu0 0.0
    %285 = vmatprep.subr.mxu0 0.0
    %286 = vmatpush2.msra.mxu0 0.0
    %287 = vmatprep.subr.mxu0 0.0
    %288 = vmatpush2.msra.mxu0 0.0
    %289 = vmatprep.subr.mxu0 0.0
    %290 = vmatpush2.msra.mxu0 0.0
    %291 = vmatprep.subr.mxu0 0.0
    %292 = vmatpush2.msra.mxu0 0.0
    %293 = vmatprep.mubr.f32.mxu0 0.0
    %294 = vmatmul.mubr.f32.gmra.mxu0 %v206
    %v295 = vpop.f32.mrf.mxu0
    %v296 = vadd.f32 %v228, %v295
    %v297 = vpop.f32.mrf.mxu0
    %298 = vdwg.mxu0
    %299 = vst [vmem:[%s3] sm:$0xff] %v296
    // Predicated region
    $region18: #{qnet_forward.1} parent=1 // pred_check
      _
    $region19: #{qnet_forward.1} parent=1 // pred_check_branch
      %301 = sbr.rel (0) target = $region21
    $region20: #{qnet_forward.1} parent=1 // pred_region
      _
    $region21: #{qnet_forward.1} parent=1 // pred_fallthru
      _
    // Predicated region
    $region22: #{qnet_forward.1} parent=1 // pred_check
      _
    $region23: #{qnet_forward.1} parent=1 // pred_check_branch
      %303 = sbr.rel (0) target = $region25
    $region24: #{qnet_forward.1} parent=1 // pred_region
      _
    $region25: #{qnet_forward.1} parent=1 // pred_fallthru
      _
    %304 = vsyncpa [#allocation3], 1

</llo_original>
